<compile_context>
chip_gen: v6e
topology: v6e:2x2x1
jax: 0.10.0
libtpu: 0.0.40
codegen_flags: <defaults>
</compile_context>

<pallas_src>
import jax
import jax.numpy as jnp
from jax import lax
from jax.experimental import pallas as pl
from jax.experimental.pallas import tpu as pltpu


def element_encoder_kernel(ids_ref, fused_ref, out_ref):
    """relu(one_hot(ids) @ fused) for one batch tile.

    ids_ref   : VMEM (TB, 1) int32   -- raw category ids (clamped here)
    fused_ref : VMEM (V, O)  float32 -- precomputed emb @ W^T + bias
    out_ref   : VMEM (TB, O) float32
    """
    tb = ids_ref.shape[0]
    v = fused_ref.shape[0]

    # PyTorch nn.Embedding raises on out-of-range ids; we clamp instead so the
    # kernel never selects out of bounds (documented behavioural difference).
    ids = jnp.clip(ids_ref[...], 0, v - 1)                        # (TB, 1)

    # In-VMEM gather via one-hot matmul on the MXU: (TB, V) @ (V, O) -> (TB, O).
    col = lax.broadcasted_iota(jnp.int32, (tb, v), dimension=1)   # (TB, V)
    one_hot = (ids == col).astype(fused_ref.dtype)                # (TB, V)
    y = jnp.dot(one_hot, fused_ref[...],
                preferred_element_type=jnp.float32)               # (TB, O)

    # relu kept in-kernel; exact either before or after the row-select since
    # each output row comes from exactly one fused-table row.
    out_ref[...] = jnp.maximum(y, 0.0).astype(out_ref.dtype)


def fuse_element_encoder_params(emb_table, weight, bias):
    """One-time weight prep (hoist out of the per-batch hot path).

    emb_table : (V, E)  nn.Embedding.weight
    weight    : (O, E)  nn.Linear.weight (PyTorch layout)
    bias      : (O,) or (1, O)
    returns   : (V, O)  fused[v] = emb_table[v] @ weight^T + bias
    """
    O = weight.shape[0]
    return emb_table @ weight.T + jnp.reshape(bias, (1, O))


def element_encoder(element, fused_table, *, block_b=512):
    """Hot path: element (B,) int ids  ->  (B, O) float32."""
    B = element.shape[0]
    V, O = fused_table.shape

    ids = element.astype(jnp.int32).reshape(B, 1)

    # Sublane-aligned batch; pad only when needed (no zeros().at[].set()).
    b8 = ((B + 7) // 8) * 8
    TB = min(block_b, b8)
    # Give the 'parallel' batch axis >= 2 steps when possible so v7x's two
    # TensorCores can split it (harmless on single-TC v5e/v6e).
    if b8 // TB < 2 and b8 >= 16:
        TB = ((b8 // 2 + 7) // 8) * 8
    Bp = pl.cdiv(b8, TB) * TB

    padded = Bp != B
    if padded:
        ids = jnp.pad(ids, ((0, Bp - B), (0, 0)))   # padded rows use id 0

    out = pl.pallas_call(
        element_encoder_kernel,
        out_shape=jax.ShapeDtypeStruct((Bp, O), jnp.float32),
        grid=(Bp // TB,),
        in_specs=[
            pl.BlockSpec((TB, 1), lambda i: (i, 0)),   # ids, per batch tile
            pl.BlockSpec((V, O), lambda i: (0, 0)),    # fused table (resident)
        ],
        out_specs=pl.BlockSpec((TB, O), lambda i: (i, 0)),
        compiler_params=pltpu.CompilerParams(
            dimension_semantics=("parallel",)),
    )(ids, fused_table)

    return out[:B] if padded else out


def element_encoder_ref(element, emb_table, weight, bias):
    x = jnp.take(emb_table, element, axis=0)                     # embedding
    return jnp.maximum(x @ weight.T + jnp.reshape(bias, (1, -1)), 0.0)


if __name__ == "__main__":
    # Small shapes consistent with the module (NAML categorical encoder):
    #   num_embeddings V=16, embedding_dim E=32, linear_output_dim O=128, batch B=8
    V, E, O, B = 16, 32, 128, 8

    key = jax.random.PRNGKey(0)
    k_emb, k_w, k_b, k_idx, k_idx2 = jax.random.split(key, 5)

    emb_table = jax.random.normal(k_emb, (V, E), dtype=jnp.float32)
    weight = jax.random.normal(k_w, (O, E), dtype=jnp.float32) * 0.1   # nn.Linear layout
    bias = jax.random.normal(k_b, (O,), dtype=jnp.float32) * 0.1

    # One-time weight fusion (out of the hot path).
    fused = fuse_element_encoder_params(emb_table, weight, bias)

    # Case 1: aligned batch (fast path, no pad / no slice).
    element = jax.random.randint(k_idx, (B,), 0, V, dtype=jnp.int32)
    out = jax.block_until_ready(element_encoder(element, fused))
    ref = element_encoder_ref(element, emb_table, weight, bias)
    assert out.shape == (B, O)
    assert jnp.allclose(out, ref, atol=1e-4, rtol=1e-4), "mismatch vs. reference (aligned)"

    # Case 2: unaligned batch (exercises pad path and >=2 grid steps).
    B2 = 20
    element2 = jax.random.randint(k_idx2, (B2,), 0, V, dtype=jnp.int32)
    out2 = jax.block_until_ready(element_encoder(element2, fused))
    ref2 = element_encoder_ref(element2, emb_table, weight, bias)
    assert out2.shape == (B2, O)
    assert jnp.allclose(out2, ref2, atol=1e-4, rtol=1e-4), "mismatch vs. reference (padded)"

    print("KERNEL_OK")
</pallas_src>

<mosaic_0001>
module attributes {stable_mosaic.version = 11 : i64} {
  func.func @element_encoder_kernel(%arg0: i32, %arg1: memref<8x1xi32, #tpu.memory_space<vmem>>, %arg2: memref<16x128xf32, #tpu.memory_space<vmem>>, %arg3: memref<8x128xf32, #tpu.memory_space<vmem>>) attributes {dimension_semantics = [#tpu.dimension_semantics<parallel>], iteration_bounds = array<i64: 1>, scalar_prefetch = 0 : i64, scratch_operands = 0 : i64, tpu.core_type = #tpu.core_type<tc>, window_params = [{transform_indices = @transform_0, window_bounds = array<i64: 8, 1>}, {pipeline_mode = #tpu.pipeline_mode<synchronous>, transform_indices = @transform_1, window_bounds = array<i64: 16, 128>}, {transform_indices = @transform_2, window_bounds = array<i64: 8, 128>}]} {
    %c0 = arith.constant 0 : index
    %c0_0 = arith.constant 0 : index
    %0 = vector.load %arg1[%c0, %c0_0] : memref<8x1xi32, #tpu.memory_space<vmem>>, vector<8x1xi32>
    %c0_i32 = arith.constant 0 : i32
    %c15_i32 = arith.constant 15 : i32
    %1 = vector.broadcast %c0_i32 : i32 to vector<8x1xi32>
    %2 = arith.maxsi %1, %0 : vector<8x1xi32>
    %3 = vector.broadcast %c15_i32 : i32 to vector<8x1xi32>
    %4 = arith.minsi %3, %2 : vector<8x1xi32>
    %5 = tpu.iota {dimensions = array<i32: 1>} : vector<8x16xi32>
    %6 = vector.broadcast %4 : vector<8x1xi32> to vector<8x16xi32>
    %7 = arith.cmpi eq, %6, %5 : vector<8x16xi32>
    %8 = arith.extui %7 : vector<8x16xi1> to vector<8x16xi32>
    %9 = arith.sitofp %8 : vector<8x16xi32> to vector<8x16xf32>
    %c0_1 = arith.constant 0 : index
    %c0_2 = arith.constant 0 : index
    %10 = vector.load %arg2[%c0_1, %c0_2] : memref<16x128xf32, #tpu.memory_space<vmem>>, vector<16x128xf32>
    %cst = arith.constant dense<0.000000e+00> : vector<8x128xf32>
    %11 = tpu.matmul %9, %10, %cst {dimension_numbers = #tpu.dot_dimension_numbers<[1], [0], [0], [1], [0, 0, 1, 1], [], []>} : vector<8x16xf32>, vector<16x128xf32>, vector<8x128xf32> -> vector<8x128xf32>
    %cst_3 = arith.constant 0.000000e+00 : f32
    %12 = vector.broadcast %cst_3 : f32 to vector<8x128xf32>
    %13 = arith.maximumf %11, %12 : vector<8x128xf32>
    %c0_4 = arith.constant 0 : index
    %c0_5 = arith.constant 0 : index
    %14 = vector.load %arg3[%c0_4, %c0_5] : memref<8x128xf32, #tpu.memory_space<vmem>>, vector<8x128xf32>
    tpu.vector_store %arg3[%c0_4, %c0_5], %13 {strides = array<i32>} : memref<8x128xf32, #tpu.memory_space<vmem>>, vector<8x128xf32>,
    return
  }
  func.func @transform_0(%arg0: i32) -> (i32, i32) {
    %c0_i32 = arith.constant 0 : i32
    %c0_i32_0 = arith.constant 0 : i32
    return %arg0, %c0_i32 : i32, i32
  }
  func.func @transform_1(%arg0: i32) -> (i32, i32) {
    %c0_i32 = arith.constant 0 : i32
    %c0_i32_0 = arith.constant 0 : i32
    %c0_i32_1 = arith.constant 0 : i32
    return %c0_i32, %c0_i32_0 : i32, i32
  }
  func.func @transform_2(%arg0: i32) -> (i32, i32) {
    %c0_i32 = arith.constant 0 : i32
    %c0_i32_0 = arith.constant 0 : i32
    return %arg0, %c0_i32 : i32, i32
  }
}

</mosaic_0001>

<llo_original>
// kernel: tpu_custom_call.1
$region0: #{tpu_custom_call.1}
  #allocation0 [shape = 'u32[]', space=smem, size = 0x4, offset = 0x4, fixed_abs, tag = 'smem constant byte address 0x4 - core index']
  #allocation1 [shape = 'u32[144,128]{1,0:T(1,128)}', space=vmem, size = 0x12000, scoped, tag = 'internal scratch']
  %s0 = inlined_call_operand.vmem [shape: s32[8,1], index: 0, kind: input, shape index: {}]
  %s1 = inlined_call_operand.hbm [shape: f32[16,128], index: 1, kind: input, shape index: {}]
  %s2 = inlined_call_operand.hbm [shape: f32[8,128], index: 2, kind: output, shape index: {}]
  %s3 = sld [smem:[#allocation0]]
  $region22: #{tpu_custom_call.1} parent=0
    _
  %s5 = ssub.s32 1, %s3
  %s6 = scalar_select 0, %s5, %s3
  $region1: #{tpu_custom_call.1} parent=0
    #allocation2 [shape = 'u8[8192]{0}', space=vmem, size = 0x2000, scoped, tag = 'input window, operand 1, single buffered']
    #allocation3 [shape = 's32[1]{0}', space=sflag, size = 0x4, scoped, tag = 'scoped memory for tpu_custom_call.1']
    #allocation4 [shape = 's32[1]{0}', space=sflag, size = 0x4, scoped, tag = 'scoped memory for tpu_custom_call.1']
    #allocation5 [shape = 'u8[4096]{0}', space=vmem, size = 0x1000, scoped, tag = 'output window, operand 0, single buffered']
    %7 = vsyncpa [#allocation3], 0
    %8 = vsyncpa [#allocation4], 0
    // Predicated region
    $region2: #{tpu_custom_call.1} parent=1 // pred_check
      _
    $region3: #{tpu_custom_call.1} parent=1 // pred_check_branch
      %10 = sbr.rel (0) target = $region5
    $region4: #{tpu_custom_call.1} parent=1 // pred_region
      _
    $region5: #{tpu_custom_call.1} parent=1 // pred_fallthru
      _
    // Predicated region
    $region6: #{tpu_custom_call.1} parent=1 // pred_check
      _
    $region7: #{tpu_custom_call.1} parent=1 // pred_check_branch
      %12 = sbr.rel (0) target = $region9
    $region8: #{tpu_custom_call.1} parent=1 // pred_region
      %s14 = ssub.s32 256, 256
      %15 = vsyncadd [#allocation3], %s14
      %s16 = sshll.u32 [#allocation2], 4
      %s17 = int_to_ptr.vmem [resolvable:$true] %s16
      %22 = dma.hbm_to_vmem [thread:$0]  %s1, 256, %s17, [#allocation3], 128, 128, 8
    $region9: #{tpu_custom_call.1} parent=1 // pred_fallthru
      _
    // Predicated region
    $region10: #{tpu_custom_call.1} parent=1 // pred_check
      _
    $region11: #{tpu_custom_call.1} parent=1 // pred_check_branch
      %24 = sbr.rel (0) target = $region13
    $region12: #{tpu_custom_call.1} parent=1 // pred_region
      %25 = dma.done [#allocation3], 256
    $region13: #{tpu_custom_call.1} parent=1 // pred_fallthru
      _
    %v26 = vld [vmem:[%s0] sm:$0xff]
    %vm27 = vcmp.gt.s32.totalorder %v26, 0
    %v28 = vsel %vm27, %v26, 0
    %vm29 = vcmp.lt.s32.totalorder %v28, 15
    %v30 = vsel %vm29, %v28, 15
    %v31 = vlaneseq
    %v32 = vand.u32 %v31, 127
    %33 = vset.pattern.permute.xlu0 0
    %34 = vperm.xlu0 %33, %v30
    %v35 = vpop.permute.xlu0 %34
    %vm36 = vcmp.eq.s32.totalorder %v35, %v32
    %v37 = vsel %vm36, 1, 0
    %v38 = vcvt.s32.f32 %v37
    %v39 = vld [vmem:[#allocation2] sm:$0xff]
    %v40 = vld [vmem:[#allocation2 + $0x8] sm:$0xff]
    %vm41 = vcmask 130048
    %v43 = vsel %vm41, %v38, 0
    %45 = vmatprep.subr.mxu0 0.0
    %46 = vmatpush1.msra.mxu0 0.0
    %47 = vmatprep.subr.mxu0 0.0
    %48 = vmatpush1.msra.mxu0 0.0
    %49 = vmatprep.subr.mxu0 0.0
    %50 = vmatpush1.msra.mxu0 0.0
    %51 = vmatprep.subr.mxu0 0.0
    %52 = vmatpush1.msra.mxu0 0.0
    %53 = vmatprep.subr.mxu0 0.0
    %54 = vmatpush1.msra.mxu0 0.0
    %55 = vmatprep.subr.mxu0 0.0
    %56 = vmatpush1.msra.mxu0 0.0
    %57 = vmatprep.subr.mxu0 0.0
    %58 = vmatpush1.msra.mxu0 0.0
    %59 = vmatprep.subr.mxu0 0.0
    %60 = vmatpush1.msra.mxu0 0.0
    %61 = vmatprep.subr.mxu0 0.0
    %62 = vmatpush1.msra.mxu0 0.0
    %63 = vmatprep.subr.mxu0 0.0
    %64 = vmatpush1.msra.mxu0 0.0
    %65 = vmatprep.subr.mxu0 0.0
    %66 = vmatpush1.msra.mxu0 0.0
    %67 = vmatprep.subr.mxu0 0.0
    %68 = vmatpush1.msra.mxu0 0.0
    %69 = vmatprep.subr.mxu0 0.0
    %70 = vmatpush1.msra.mxu0 0.0
    %71 = vmatprep.subr.mxu0 0.0
    %72 = vmatpush1.msra.mxu0 0.0
    %73 = vmatprep.subr.mxu0 0.0
    %74 = vmatpush1.msra.mxu0 %v40
    %75 = vmatprep.subr.mxu0 0.0
    %76 = vmatpush1.msra.mxu0 %v39
    %77 = vmatprep.subr.mxu0 0.0
    %78 = vmatpush2.msra.mxu0 0.0
    %79 = vmatprep.subr.mxu0 0.0
    %80 = vmatpush2.msra.mxu0 0.0
    %81 = vmatprep.subr.mxu0 0.0
    %82 = vmatpush2.msra.mxu0 0.0
    %83 = vmatprep.subr.mxu0 0.0
    %84 = vmatpush2.msra.mxu0 0.0
    %85 = vmatprep.subr.mxu0 0.0
    %86 = vmatpush2.msra.mxu0 0.0
    %87 = vmatprep.subr.mxu0 0.0
    %88 = vmatpush2.msra.mxu0 0.0
    %89 = vmatprep.subr.mxu0 0.0
    %90 = vmatpush2.msra.mxu0 0.0
    %91 = vmatprep.subr.mxu0 0.0
    %92 = vmatpush2.msra.mxu0 0.0
    %93 = vmatprep.subr.mxu0 0.0
    %94 = vmatpush2.msra.mxu0 0.0
    %95 = vmatprep.subr.mxu0 0.0
    %96 = vmatpush2.msra.mxu0 0.0
    %97 = vmatprep.subr.mxu0 0.0
    %98 = vmatpush2.msra.mxu0 0.0
    %99 = vmatprep.subr.mxu0 0.0
    %100 = vmatpush2.msra.mxu0 0.0
    %101 = vmatprep.subr.mxu0 0.0
    %102 = vmatpush2.msra.mxu0 0.0
    %103 = vmatprep.subr.mxu0 0.0
    %104 = vmatpush2.msra.mxu0 0.0
    %105 = vmatprep.subr.mxu0 0.0
    %106 = vmatpush2.msra.mxu0 0.0
    %107 = vmatprep.subr.mxu0 0.0
    %108 = vmatpush2.msra.mxu0 0.0
    %109 = vmatprep.mubr.f32.mxu0 0.0
    %110 = vmatmul.mubr.f32.gmra.mxu0 %v43
    %v111 = vpop.f32.mrf.mxu0
    %v112 = vadd.f32 0.0, %v111
    %v113 = vpop.f32.mrf.mxu0
    %114 = vdwg.mxu0
    %v115 = vmax.f32 %v112, 0.0
    %116 = vst [vmem:[#allocation5] sm:$0xff] %v115
    // Predicated region
    $region14: #{tpu_custom_call.1} parent=1 // pred_check
      _
    $region15: #{tpu_custom_call.1} parent=1 // pred_check_branch
      %118 = sbr.rel (0) target = $region17
    $region16: #{tpu_custom_call.1} parent=1 // pred_region
      %s120 = ssub.s32 128, 128
      %121 = vsyncadd [#allocation4], %s120
      %s123 = sshll.u32 [#allocation5], 4
      %s124 = int_to_ptr.vmem [resolvable:$true] %s123
      %126 = dma.vmem_to_hbm [thread:$0]  %s124, 128, %s2, [#allocation4]
    $region17: #{tpu_custom_call.1} parent=1 // pred_fallthru
      _
    // Predicated region
    $region18: #{tpu_custom_call.1} parent=1 // pred_check
      _
    $region19: #{tpu_custom_call.1} parent=1 // pred_check_branch
      %128 = sbr.rel (0) target = $region21
    $region20: #{tpu_custom_call.1} parent=1 // pred_region
      %129 = dma.done [#allocation4], 128
    $region21: #{tpu_custom_call.1} parent=1 // pred_fallthru
      _
    %130 = vsyncpa [#allocation3], 1
    %131 = vsyncpa [#allocation4], 1

</llo_original>
